<compile_context>
chip_gen: v7x
topology: tpu7x:2x2x1
jax: 0.10.0
libtpu: 0.0.40
codegen_flags: <defaults>
</compile_context>

<pallas_src>
import jax
import jax.numpy as jnp
from jax.experimental import pallas as pl
from jax.experimental.pallas import tpu as pltpu


def _vmem_spec():
    return pl.BlockSpec(memory_space=pltpu.MemorySpace.VMEM)


# ---------------- fused Pallas kernel ----------------

def fused_kernel(s_ref, r_ref, a_ref, wfs_ref, wfr_ref, wfa_ref, b_ref, out_ref):
    """Three folded matmuls (one per modality) -> +b_fold -> exact softmax, all in VMEM."""
    def dot(x_ref, w_ref):
        # bf16 operands (explicit, intentional) with f32 MXU accumulation.
        return jnp.dot(x_ref[...].astype(jnp.bfloat16), w_ref[...],
                       preferred_element_type=jnp.float32)

    # (B, T*sd)@(T*sd, Kp) + (B, T*rd)@(T*rd, Kp) + (B, T*ad)@(T*ad, Kp) + (1, Kp)
    # Pad lanes get logits == -1e30 (zero weight columns + -1e30 bias), so exp underflows
    # to 0 and they do not pollute the softmax denominator.
    logits = dot(s_ref, wfs_ref) + dot(r_ref, wfr_ref) + dot(a_ref, wfa_ref) + b_ref[...]
    m = jnp.max(logits, axis=-1, keepdims=True)
    e = jnp.exp(logits - m)
    out_ref[...] = e / jnp.sum(e, axis=-1, keepdims=True)   # exact divide (launch-bound)


# ---------------- wrapper (only free reshapes, no concat) ----------------

def basic_model_forward(packed, R, s, a, t=None):   # `t` unused, exactly as in PyTorch forward
    B = R.shape[0]
    K = packed["action_dim"]
    Kp = packed["b_fold"].shape[1]
    # Row-major (B, T, F) -> (B, T*F) reshapes are layout-trivial; no [s|R|a] concatenate.
    s_flat = s.reshape(B, -1)
    r_flat = R.reshape(B, -1)
    a_flat = a.reshape(B, -1)
    probs_pad = pl.pallas_call(
        fused_kernel,
        out_shape=jax.ShapeDtypeStruct((B, Kp), jnp.float32),
        in_specs=[_vmem_spec() for _ in range(7)],
        out_specs=_vmem_spec(),
    )(s_flat, r_flat, a_flat,
      packed["Wf_s"], packed["Wf_r"], packed["Wf_a"], packed["b_fold"])
    return probs_pad[:, :K]


# ---------------- deterministic parameter init (torch layout) ----------------

def init_params(key, d_model, state_dim, action_dim, r_dim, seq_len):
    ks = jax.random.split(key, 5)

    def torch_linear(k, fan_in, fan_out):
        bound = 1.0 / (fan_in ** 0.5)
        kw, kb = jax.random.split(k)
        W = jax.random.uniform(kw, (fan_out, fan_in), jnp.float32, -bound, bound)
        b = jax.random.uniform(kb, (fan_out,), jnp.float32, -bound, bound)
        return W, b                                                   # torch (out, in) layout

    Ws, bs = torch_linear(ks[0], state_dim, d_model)
    Wr, br = torch_linear(ks[1], r_dim, d_model)
    Wa, ba = torch_linear(ks[2], action_dim, d_model)
    pos = jax.random.normal(ks[3], (seq_len, d_model), jnp.float32)   # nn.Embedding ~ N(0,1)
    W_lin, b_lin = torch_linear(ks[4], 3 * seq_len * d_model, action_dim)
    return dict(Ws=Ws, bs=bs, Wr=Wr, br=br, Wa=Wa, ba=ba, pos=pos,
                W_lin=W_lin, b_lin=b_lin)


# ---------------- one-time offline fold (no kron, full f32 precision) ----------------

def pack_params(p, d_model, state_dim, action_dim, r_dim, seq_len, k_pad=128):
    D, T, K = d_model, seq_len, action_dim
    hp = jax.lax.Precision.HIGHEST        # offline fold in true f32 (regular XLA, not Pallas)

    # Torch hidden flat index is t*3D + j*D + c with j in {0: s, 1: R, 2: a}.
    Wh = p["W_lin"].T.reshape(T, 3, D, K)                            # (T, 3, D, K)

    # Per-modality folded weights; row index t*dim + f matches s/R/a.reshape(B, T*dim).
    Wf_s = jnp.einsum("cf,tck->tfk", p["Ws"], Wh[:, 0], precision=hp).reshape(T * state_dim, K)
    Wf_r = jnp.einsum("cf,tck->tfk", p["Wr"], Wh[:, 1], precision=hp).reshape(T * r_dim, K)
    Wf_a = jnp.einsum("cf,tck->tfk", p["Wa"], Wh[:, 2], precision=hp).reshape(T * action_dim, K)

    # Folded bias: embedding biases + positional embeddings pushed through the head + head bias.
    bias_pos = jnp.stack([p["bs"], p["br"], p["ba"]])[None, :, :] + p["pos"][:, None, :]  # (T,3,D)
    b_fold = jnp.einsum("tjc,tjck->k", bias_pos, Wh, precision=hp) + p["b_lin"]           # (K,)

    # Lane-dense padding to Kp=128: pad weight columns are 0, pad bias entries are -1e30,
    # so the pad-lane mask lives entirely in the parameters (no in-kernel iota/where).
    def pad_w(W):
        return jnp.pad(W, ((0, 0), (0, k_pad - K))).astype(jnp.bfloat16)

    b_fold_pad = jnp.full((1, k_pad), -1e30, jnp.float32).at[0, :K].set(b_fold)

    return dict(Wf_s=pad_w(Wf_s), Wf_r=pad_w(Wf_r), Wf_a=pad_w(Wf_a),
                b_fold=b_fold_pad, action_dim=K)


# ---------------- pure-JAX reference (mirrors the PyTorch forward, full f32) ----------------

def reference_forward(p, R, s, a):
    hp = jax.lax.Precision.HIGHEST
    pos = p["pos"]
    s_emb = jnp.dot(s, p["Ws"].T, precision=hp) + p["bs"] + pos
    a_emb = jnp.dot(a, p["Wa"].T, precision=hp) + p["ba"] + pos
    r_emb = jnp.dot(R, p["Wr"].T, precision=hp) + p["br"] + pos
    x = jnp.stack([s_emb, r_emb, a_emb], axis=1)                      # (B, 3, T, D)
    x = jnp.transpose(x, (0, 2, 1, 3)).reshape(R.shape[0], -1)        # (B, 3*T*D)
    logits = jnp.dot(x, p["W_lin"].T, precision=hp) + p["b_lin"]
    return jax.nn.softmax(logits, axis=-1)


if __name__ == "__main__":
    # Small shapes consistent with BasicModel(d_model, state_dim, action_dim, r_dim, seq_len, B)
    d_model, state_dim, action_dim, r_dim, seq_len, B = 32, 10, 4, 10, 8, 2

    key = jax.random.PRNGKey(0)
    kp, kR, ksi, ka = jax.random.split(key, 4)
    params = init_params(kp, d_model, state_dim, action_dim, r_dim, seq_len)
    packed = pack_params(params, d_model, state_dim, action_dim, r_dim, seq_len)

    R = jax.random.normal(kR, (B, seq_len, r_dim), jnp.float32)
    s = jax.random.normal(ksi, (B, seq_len, state_dim), jnp.float32)
    a = jax.random.normal(ka, (B, seq_len, action_dim), jnp.float32)
    t = jnp.arange(seq_len)                                  # unused, as in the PyTorch forward

    out = basic_model_forward(packed, R, s, a, t)
    out = jax.block_until_ready(out)

    ref = reference_forward(params, R, s, a)
    assert out.shape == (B, action_dim), out.shape
    # Softmax rows now sum to 1 exactly (exact divide).  Remaining tolerance is solely the
    # intentional bf16 storage of the folded weights/activations vs. the full-f32 reference.
    assert jnp.allclose(jnp.sum(out, axis=-1), 1.0, atol=1e-5)
    assert jnp.allclose(out, ref, atol=2e-3, rtol=2e-3), (out, ref)
    print("KERNEL_OK")
</pallas_src>

<mosaic_0001>
module attributes {stable_mosaic.version = 11 : i64} {
  func.func @fused_kernel(%arg0: memref<2x80xf32, #tpu.memory_space<vmem>>, %arg1: memref<2x80xf32, #tpu.memory_space<vmem>>, %arg2: memref<2x32xf32, #tpu.memory_space<vmem>>, %arg3: memref<80x128xbf16, #tpu.memory_space<vmem>>, %arg4: memref<80x128xbf16, #tpu.memory_space<vmem>>, %arg5: memref<32x128xbf16, #tpu.memory_space<vmem>>, %arg6: memref<1x128xf32, #tpu.memory_space<vmem>>, %arg7: memref<2x128xf32, #tpu.memory_space<vmem>>) attributes {dimension_semantics = [], scalar_prefetch = 0 : i64, scratch_operands = 0 : i64, tpu.core_type = #tpu.core_type<tc>} {
    %c0 = arith.constant 0 : index
    %c0_0 = arith.constant 0 : index
    %0 = vector.load %arg0[%c0, %c0_0] : memref<2x80xf32, #tpu.memory_space<vmem>>, vector<2x80xf32>
    %1 = arith.truncf %0 : vector<2x80xf32> to vector<2x80xbf16>
    %c0_1 = arith.constant 0 : index
    %c0_2 = arith.constant 0 : index
    %2 = vector.load %arg3[%c0_1, %c0_2] : memref<80x128xbf16, #tpu.memory_space<vmem>>, vector<80x128xbf16>
    %cst = arith.constant dense<0.000000e+00> : vector<2x128xf32>
    %3 = tpu.matmul %1, %2, %cst {dimension_numbers = #tpu.dot_dimension_numbers<[1], [0], [0], [1], [0, 0, 1, 1], [], []>} : vector<2x80xbf16>, vector<80x128xbf16>, vector<2x128xf32> -> vector<2x128xf32>
    %c0_3 = arith.constant 0 : index
    %c0_4 = arith.constant 0 : index
    %4 = vector.load %arg1[%c0_3, %c0_4] : memref<2x80xf32, #tpu.memory_space<vmem>>, vector<2x80xf32>
    %5 = arith.truncf %4 : vector<2x80xf32> to vector<2x80xbf16>
    %c0_5 = arith.constant 0 : index
    %c0_6 = arith.constant 0 : index
    %6 = vector.load %arg4[%c0_5, %c0_6] : memref<80x128xbf16, #tpu.memory_space<vmem>>, vector<80x128xbf16>
    %cst_7 = arith.constant dense<0.000000e+00> : vector<2x128xf32>
    %7 = tpu.matmul %5, %6, %cst_7 {dimension_numbers = #tpu.dot_dimension_numbers<[1], [0], [0], [1], [0, 0, 1, 1], [], []>} : vector<2x80xbf16>, vector<80x128xbf16>, vector<2x128xf32> -> vector<2x128xf32>
    %8 = arith.addf %3, %7 : vector<2x128xf32>
    %c0_8 = arith.constant 0 : index
    %c0_9 = arith.constant 0 : index
    %9 = vector.load %arg2[%c0_8, %c0_9] : memref<2x32xf32, #tpu.memory_space<vmem>>, vector<2x32xf32>
    %10 = arith.truncf %9 : vector<2x32xf32> to vector<2x32xbf16>
    %c0_10 = arith.constant 0 : index
    %c0_11 = arith.constant 0 : index
    %11 = vector.load %arg5[%c0_10, %c0_11] : memref<32x128xbf16, #tpu.memory_space<vmem>>, vector<32x128xbf16>
    %cst_12 = arith.constant dense<0.000000e+00> : vector<2x128xf32>
    %12 = tpu.matmul %10, %11, %cst_12 {dimension_numbers = #tpu.dot_dimension_numbers<[1], [0], [0], [1], [0, 0, 1, 1], [], []>} : vector<2x32xbf16>, vector<32x128xbf16>, vector<2x128xf32> -> vector<2x128xf32>
    %13 = arith.addf %8, %12 : vector<2x128xf32>
    %c0_13 = arith.constant 0 : index
    %c0_14 = arith.constant 0 : index
    %14 = vector.load %arg6[%c0_13, %c0_14] : memref<1x128xf32, #tpu.memory_space<vmem>>, vector<1x128xf32>
    %15 = vector.broadcast %14 : vector<1x128xf32> to vector<2x128xf32>
    %16 = arith.addf %13, %15 : vector<2x128xf32>
    %cst_15 = arith.constant dense<0xFF800000> : vector<2xf32>
    %17 = vector.multi_reduction <maximumf>, %16, %cst_15 [1] : vector<2x128xf32> to vector<2xf32>
    %18 = vector.shape_cast %17 : vector<2xf32> to vector<2x1xf32>
    %19 = vector.broadcast %18 : vector<2x1xf32> to vector<2x128xf32>
    %20 = arith.subf %16, %19 : vector<2x128xf32>
    %21 = math.exp %20 : vector<2x128xf32>
    %cst_16 = arith.constant dense<0.000000e+00> : vector<2xf32>
    %22 = vector.multi_reduction <add>, %21, %cst_16 [1] : vector<2x128xf32> to vector<2xf32>
    %23 = vector.shape_cast %22 : vector<2xf32> to vector<2x1xf32>
    %24 = vector.broadcast %23 : vector<2x1xf32> to vector<2x128xf32>
    %25 = arith.divf %21, %24 : vector<2x128xf32>
    %c0_17 = arith.constant 0 : index
    %c0_18 = arith.constant 0 : index
    %26 = vector.load %arg7[%c0_17, %c0_18] : memref<2x128xf32, #tpu.memory_space<vmem>>, vector<2x128xf32>
    tpu.vector_store %arg7[%c0_17, %c0_18], %25 {strides = array<i32>} : memref<2x128xf32, #tpu.memory_space<vmem>>, vector<2x128xf32>,
    return
  }
}

</mosaic_0001>

<llo_original>
// kernel: tpu_custom_call.1
$region0: #{tpu_custom_call.1}
  #allocation0 [shape = 'u32[]', space=smem, size = 0x4, offset = 0x4, fixed_abs, tag = 'smem constant byte address 0x4 - core index']
  #allocation1 [shape = 'u32[144,128]{1,0:T(1,128)}', space=vmem, size = 0x12000, scoped, tag = 'internal scratch']
  %s0 = inlined_call_operand.hbm [shape: f32[2,80], index: 0, kind: input, shape index: {}]
  %s1 = inlined_call_operand.vmem [shape: f32[2,80], index: 1, kind: input, shape index: {}]
  %s2 = inlined_call_operand.hbm [shape: f32[2,32], index: 2, kind: input, shape index: {}]
  %s3 = inlined_call_operand.hbm [shape: bf16[80,128], index: 3, kind: input, shape index: {}]
  %s4 = inlined_call_operand.hbm [shape: bf16[80,128], index: 4, kind: input, shape index: {}]
  %s5 = inlined_call_operand.vmem [shape: bf16[32,128], index: 5, kind: input, shape index: {}]
  %s6 = inlined_call_operand.vmem [shape: f32[1,128], index: 6, kind: input, shape index: {}]
  %s7 = inlined_call_operand.hbm [shape: f32[2,128], index: 7, kind: output, shape index: {}]
  %s8 = sld [smem:[#allocation0]]
  $region54: #{tpu_custom_call.1} parent=0
    _
  %s10 = ssub.s32 1, %s8
  %s11 = scalar_select 0, %s10, %s8
  $region1: #{tpu_custom_call.1} parent=0
    #allocation2 [shape = 'u8[1024]{0}', space=vmem, size = 0x400, scoped, tag = 'input window, operand 0, single buffered']
    #allocation3 [shape = 's32[1]{0}', space=sflag, size = 0x4, scoped, tag = 'scoped memory for tpu_custom_call.1']
    #allocation4 [shape = 's32[1]{0}', space=sflag, size = 0x4, scoped, tag = 'scoped memory for tpu_custom_call.1']
    #allocation5 [shape = 'u8[1024]{0}', space=vmem, size = 0x400, scoped, tag = 'input window, operand 2, single buffered']
    #allocation6 [shape = 's32[1]{0}', space=sflag, size = 0x4, scoped, tag = 'scoped memory for tpu_custom_call.1']
    #allocation7 [shape = 'u8[20480]{0}', space=vmem, size = 0x5000, scoped, tag = 'input window, operand 3, single buffered']
    #allocation8 [shape = 'u8[20480]{0}', space=vmem, size = 0x5000, scoped, tag = 'input window, operand 4, single buffered']
    #allocation9 [shape = 's32[1]{0}', space=sflag, size = 0x4, scoped, tag = 'scoped memory for tpu_custom_call.1']
    #allocation10 [shape = 'u8[1024]{0}', space=vmem, size = 0x400, scoped, tag = 'output window, operand 0, single buffered']
    %12 = vsyncpa [#allocation3], 0
    %13 = vsyncpa [#allocation6], 0
    %14 = vsyncpa [#allocation9], 0
    %15 = vsyncpa [#allocation4], 0
    // Predicated region
    $region2: #{tpu_custom_call.1} parent=1 // pred_check
      _
    $region3: #{tpu_custom_call.1} parent=1 // pred_check_branch
      %17 = sbr.rel (0) target = $region5
    $region4: #{tpu_custom_call.1} parent=1 // pred_region
      %s19 = ssub.s32 32, 32
      %20 = vsyncadd [#allocation3], %s19
      %s22 = sshll.u32 [#allocation2], 4
      %s23 = int_to_ptr.vmem [resolvable:$true] %s22
      %25 = dma.hbm_to_vmem [thread:$0]  %s0, 32, %s23, [#allocation3]
    $region5: #{tpu_custom_call.1} parent=1 // pred_fallthru
      _
    // Predicated region
    $region6: #{tpu_custom_call.1} parent=1 // pred_check
      _
    $region7: #{tpu_custom_call.1} parent=1 // pred_check_branch
      %27 = sbr.rel (0) target = $region9
    $region8: #{tpu_custom_call.1} parent=1 // pred_region
      _
    $region9: #{tpu_custom_call.1} parent=1 // pred_fallthru
      _
    // Predicated region
    $region10: #{tpu_custom_call.1} parent=1 // pred_check
      _
    $region11: #{tpu_custom_call.1} parent=1 // pred_check_branch
      %29 = sbr.rel (0) target = $region13
    $region12: #{tpu_custom_call.1} parent=1 // pred_region
      %s31 = ssub.s32 32, 32
      %32 = vsyncadd [#allocation6], %s31
      %s34 = sshll.u32 [#allocation5], 4
      %s35 = int_to_ptr.vmem [resolvable:$true] %s34
      %37 = dma.hbm_to_vmem [thread:$0]  %s2, 32, %s35, [#allocation6]
    $region13: #{tpu_custom_call.1} parent=1 // pred_fallthru
      _
    // Predicated region
    $region14: #{tpu_custom_call.1} parent=1 // pred_check
      _
    $region15: #{tpu_custom_call.1} parent=1 // pred_check_branch
      %39 = sbr.rel (0) target = $region17
    $region16: #{tpu_custom_call.1} parent=1 // pred_region
      %s41 = ssub.s32 640, 640
      %42 = vsyncadd [#allocation6], %s41
      %s43 = sshll.u32 [#allocation7], 4
      %s44 = int_to_ptr.vmem [resolvable:$true] %s43
      %49 = dma.hbm_to_vmem [thread:$0]  %s3, 640, %s44, [#allocation6], 64, 64, 4
    $region17: #{tpu_custom_call.1} parent=1 // pred_fallthru
      _
    // Predicated region
    $region18: #{tpu_custom_call.1} parent=1 // pred_check
      _
    $region19: #{tpu_custom_call.1} parent=1 // pred_check_branch
      %51 = sbr.rel (0) target = $region21
    $region20: #{tpu_custom_call.1} parent=1 // pred_region
      %s53 = ssub.s32 640, 640
      %54 = vsyncadd [#allocation9], %s53
      %s55 = sshll.u32 [#allocation8], 4
      %s56 = int_to_ptr.vmem [resolvable:$true] %s55
      %61 = dma.hbm_to_vmem [thread:$0]  %s4, 640, %s56, [#allocation9], 64, 64, 4
    $region21: #{tpu_custom_call.1} parent=1 // pred_fallthru
      _
    // Predicated region
    $region22: #{tpu_custom_call.1} parent=1 // pred_check
      _
    $region23: #{tpu_custom_call.1} parent=1 // pred_check_branch
      %63 = sbr.rel (0) target = $region25
    $region24: #{tpu_custom_call.1} parent=1 // pred_region
      _
    $region25: #{tpu_custom_call.1} parent=1 // pred_fallthru
      _
    // Predicated region
    $region26: #{tpu_custom_call.1} parent=1 // pred_check
      _
    $region27: #{tpu_custom_call.1} parent=1 // pred_check_branch
      %65 = sbr.rel (0) target = $region29
    $region28: #{tpu_custom_call.1} parent=1 // pred_region
      _
    $region29: #{tpu_custom_call.1} parent=1 // pred_fallthru
      _
    // Predicated region
    $region30: #{tpu_custom_call.1} parent=1 // pred_check
      _
    $region31: #{tpu_custom_call.1} parent=1 // pred_check_branch
      %67 = sbr.rel (0) target = $region33
    $region32: #{tpu_custom_call.1} parent=1 // pred_region
      %68 = dma.done [#allocation3], 32
    $region33: #{tpu_custom_call.1} parent=1 // pred_fallthru
      _
    // Predicated region
    $region34: #{tpu_custom_call.1} parent=1 // pred_check
      _
    $region35: #{tpu_custom_call.1} parent=1 // pred_check_branch
      %70 = sbr.rel (0) target = $region37
    $region36: #{tpu_custom_call.1} parent=1 // pred_region
      %71 = dma.done [#allocation6], 32
    $region37: #{tpu_custom_call.1} parent=1 // pred_fallthru
      _
    // Predicated region
    $region38: #{tpu_custom_call.1} parent=1 // pred_check
      _
    $region39: #{tpu_custom_call.1} parent=1 // pred_check_branch
      %73 = sbr.rel (0) target = $region41
    $region40: #{tpu_custom_call.1} parent=1 // pred_region
      %74 = dma.done [#allocation6], 640
    $region41: #{tpu_custom_call.1} parent=1 // pred_fallthru
      _
    // Predicated region
    $region42: #{tpu_custom_call.1} parent=1 // pred_check
      _
    $region43: #{tpu_custom_call.1} parent=1 // pred_check_branch
      %76 = sbr.rel (0) target = $region45
    $region44: #{tpu_custom_call.1} parent=1 // pred_region
      %77 = dma.done [#allocation9], 640
    $region45: #{tpu_custom_call.1} parent=1 // pred_fallthru
      _
    %v79 = vld [vmem:[#allocation2] sm:$0x3]
    %v80 = vpack.c.bf16 %v79, %v79
    %v81 = vld [vmem:[#allocation7] sm:$0xf]
    %v82 = vld [vmem:[#allocation7 + $0x4] sm:$0xf]
    %v83 = vld [vmem:[#allocation7 + $0x8] sm:$0xf]
    %v84 = vld [vmem:[#allocation7 + $0xc] sm:$0xf]
    %v85 = vld [vmem:[#allocation7 + $0x10] sm:$0xf]
    %v86 = vld [vmem:[#allocation7 + $0x14] sm:$0xf]
    %v87 = vld [vmem:[#allocation7 + $0x18] sm:$0xf]
    %v88 = vld [vmem:[#allocation7 + $0x1c] sm:$0xf]
    %v89 = vld [vmem:[#allocation7 + $0x20] sm:$0xf]
    %v90 = vld [vmem:[#allocation7 + $0x24] sm:$0xf]
    %v91 = vld [vmem:[%s1] sm:$0x3]
    %v92 = vpack.c.bf16 %v91, %v91
    %v93 = vld [vmem:[#allocation8] sm:$0xf]
    %v94 = vld [vmem:[#allocation8 + $0x4] sm:$0xf]
    %v95 = vld [vmem:[#allocation8 + $0x8] sm:$0xf]
    %v96 = vld [vmem:[#allocation8 + $0xc] sm:$0xf]
    %v97 = vld [vmem:[#allocation8 + $0x10] sm:$0xf]
    %v98 = vld [vmem:[#allocation8 + $0x14] sm:$0xf]
    %v99 = vld [vmem:[#allocation8 + $0x18] sm:$0xf]
    %v100 = vld [vmem:[#allocation8 + $0x1c] sm:$0xf]
    %v101 = vld [vmem:[#allocation8 + $0x20] sm:$0xf]
    %v102 = vld [vmem:[#allocation8 + $0x24] sm:$0xf]
    %v113 = vunpack.c.l.b16 %v93
    %v114 = vunpack.c.l.b16 %v94
    %v115 = vunpack.c.l.b16 %v95
    %v116 = vunpack.c.l.b16 %v96
    %v117 = vunpack.c.l.b16 %v97
    %v118 = vunpack.c.l.b16 %v98
    %v119 = vunpack.c.l.b16 %v99
    %v120 = vunpack.c.l.b16 %v100
    %v121 = vunpack.c.l.b16 %v101
    %v122 = vunpack.c.l.b16 %v102
    %v123 = vpack.c.b16 %v114, %v113
    %v124 = vpack.c.b16 %v116, %v115
    %v125 = vpack.c.b16 %v118, %v117
    %v126 = vpack.c.b16 %v120, %v119
    %v127 = vpack.c.b16 %v122, %v121
    %vm133 = vcmask 654336
    %v135 = vsel %vm133, %v92, 0
    %137 = vmatprep.subr.bf16.mxu0 0
    %138 = vmatpush1.bf16.msra.mxu0 %v123
    %139 = vmatprep.subr.bf16.mxu0 0
    %140 = vmatpush1.bf16.msra.mxu0 %v124
    %141 = vmatprep.subr.bf16.mxu0 0
    %142 = vmatpush1.bf16.msra.mxu0 %v125
    %143 = vmatprep.subr.bf16.mxu0 0
    %144 = vmatpush1.bf16.msra.mxu0 %v126
    %145 = vmatprep.subr.bf16.mxu0 0
    %146 = vmatpush1.bf16.msra.mxu0 %v127
    %147 = vmatprep.subr.bf16.mxu0 0
    %148 = vmatpush1.bf16.msra.mxu0 0
    %149 = vmatprep.subr.bf16.mxu0 0
    %150 = vmatpush1.bf16.msra.mxu0 0
    %151 = vmatprep.subr.bf16.mxu0 0
    %152 = vmatpush1.bf16.msra.mxu0 0
    %153 = vmatprep.subr.bf16.mxu0 0
    %154 = vmatpush1.bf16.msra.mxu0 0
    %155 = vmatprep.subr.bf16.mxu0 0
    %156 = vmatpush1.bf16.msra.mxu0 0
    %157 = vmatprep.subr.bf16.mxu0 0
    %158 = vmatpush1.bf16.msra.mxu0 0
    %159 = vmatprep.subr.bf16.mxu0 0
    %160 = vmatpush1.bf16.msra.mxu0 0
    %161 = vmatprep.subr.bf16.mxu0 0
    %162 = vmatpush1.bf16.msra.mxu0 0
    %163 = vmatprep.subr.bf16.mxu0 0
    %164 = vmatpush1.bf16.msra.mxu0 0
    %165 = vmatprep.subr.bf16.mxu0 0
    %166 = vmatpush1.bf16.msra.mxu0 0
    %167 = vmatprep.subr.bf16.mxu0 0
    %168 = vmatpush1.bf16.msra.mxu0 0
    %169 = vmatprep.mubr.bf16.mxu0 0
    %170 = vmatmul.mubr.bf16.gmra.mrb[0].mxu0 %v135
    %v171 = vpop.f32.mrb[0].mxu0
    %v172 = vadd.f32 0.0, %v171
    %v173 = vpop.f32.mrb[0].mxu0
    %v174 = vpop.f32.mrb[0].mxu0
    %v175 = vpop.f32.mrb[0].mxu0
    %176 = vdwg.mxu0
    %v187 = vunpack.c.l.b16 %v81
    %v188 = vunpack.c.l.b16 %v82
    %v189 = vunpack.c.l.b16 %v83
    %v190 = vunpack.c.l.b16 %v84
    %v191 = vunpack.c.l.b16 %v85
    %v192 = vunpack.c.l.b16 %v86
    %v193 = vunpack.c.l.b16 %v87
    %v194 = vunpack.c.l.b16 %v88
    %v195 = vunpack.c.l.b16 %v89
    %v196 = vunpack.c.l.b16 %v90
    %v197 = vpack.c.b16 %v188, %v187
    %v198 = vpack.c.b16 %v190, %v189
    %v199 = vpack.c.b16 %v192, %v191
    %v200 = vpack.c.b16 %v194, %v193
    %v201 = vpack.c.b16 %v196, %v195
    %v208 = vsel %vm133, %v80, 0
    %210 = vmatprep.subr.bf16.mxu0 0
    %211 = vmatpush1.bf16.msra.mxu0 %v197
    %212 = vmatprep.subr.bf16.mxu0 0
    %213 = vmatpush1.bf16.msra.mxu0 %v198
    %214 = vmatprep.subr.bf16.mxu0 0
    %215 = vmatpush1.bf16.msra.mxu0 %v199
    %216 = vmatprep.subr.bf16.mxu0 0
    %217 = vmatpush1.bf16.msra.mxu0 %v200
    %218 = vmatprep.subr.bf16.mxu0 0
    %219 = vmatpush1.bf16.msra.mxu0 %v201
    %220 = vmatprep.subr.bf16.mxu0 0
    %221 = vmatpush1.bf16.msra.mxu0 0
    %222 = vmatprep.subr.bf16.mxu0 0
    %223 = vmatpush1.bf16.msra.mxu0 0
    %224 = vmatprep.subr.bf16.mxu0 0
    %225 = vmatpush1.bf16.msra.mxu0 0
    %226 = vmatprep.subr.bf16.mxu0 0
    %227 = vmatpush1.bf16.msra.mxu0 0
    %228 = vmatprep.subr.bf16.mxu0 0
    %229 = vmatpush1.bf16.msra.mxu0 0
    %230 = vmatprep.subr.bf16.mxu0 0
    %231 = vmatpush1.bf16.msra.mxu0 0
    %232 = vmatprep.subr.bf16.mxu0 0
    %233 = vmatpush1.bf16.msra.mxu0 0
    %234 = vmatprep.subr.bf16.mxu0 0
    %235 = vmatpush1.bf16.msra.mxu0 0
    %236 = vmatprep.subr.bf16.mxu0 0
    %237 = vmatpush1.bf16.msra.mxu0 0
    %238 = vmatprep.subr.bf16.mxu0 0
    %239 = vmatpush1.bf16.msra.mxu0 0
    %240 = vmatprep.subr.bf16.mxu0 0
    %241 = vmatpush1.bf16.msra.mxu0 0
    %242 = vmatprep.mubr.bf16.mxu0 0
    %243 = vmatmul.mubr.bf16.gmra.mrb[0].mxu0 %v208
    %v244 = vpop.f32.mrb[0].mxu0
    %v245 = vadd.f32 %v172, %v244
    %v246 = vpop.f32.mrb[0].mxu0
    %v247 = vpop.f32.mrb[0].mxu0
    %v248 = vpop.f32.mrb[0].mxu0
    %249 = vdwg.mxu0
    %v250 = vld [vmem:[#allocation5] sm:$0x3]
    %v251 = vpack.c.bf16 %v250, %v250
    %v252 = vld [vmem:[%s5] sm:$0xf]
    %v253 = vld [vmem:[%s5 + $0x4] sm:$0xf]
    %v254 = vld [vmem:[%s5 + $0x8] sm:$0xf]
    %v255 = vld [vmem:[%s5 + $0xc] sm:$0xf]
    %v260 = vunpack.c.l.b16 %v252
    %v261 = vunpack.c.l.b16 %v253
    %v262 = vunpack.c.l.b16 %v254
    %v263 = vunpack.c.l.b16 %v255
    %v264 = vpack.c.b16 %v261, %v260
    %v265 = vpack.c.b16 %v263, %v262
    %vm268 = vcmask 261120
    %v270 = vsel %vm268, %v251, 0
    %272 = vmatprep.subr.bf16.mxu0 0
    %273 = vmatpush1.bf16.msra.mxu0 %v264
    %274 = vmatprep.subr.bf16.mxu0 0
    %275 = vmatpush1.bf16.msra.mxu0 %v265
    %276 = vmatprep.subr.bf16.mxu0 0
    %277 = vmatpush1.bf16.msra.mxu0 0
    %278 = vmatprep.subr.bf16.mxu0 0
    %279 = vmatpush1.bf16.msra.mxu0 0
    %280 = vmatprep.subr.bf16.mxu0 0
    %281 = vmatpush1.bf16.msra.mxu0 0
    %282 = vmatprep.subr.bf16.mxu0 0
    %283 = vmatpush1.bf16.msra.mxu0 0
    %284 = vmatprep.subr.bf16.mxu0 0
    %285 = vmatpush1.bf16.msra.mxu0 0
    %286 = vmatprep.subr.bf16.mxu0 0
    %287 = vmatpush1.bf16.msra.mxu0 0
    %288 = vmatprep.subr.bf16.mxu0 0
    %289 = vmatpush1.bf16.msra.mxu0 0
    %290 = vmatprep.subr.bf16.mxu0 0
    %291 = vmatpush1.bf16.msra.mxu0 0
    %292 = vmatprep.subr.bf16.mxu0 0
    %293 = vmatpush1.bf16.msra.mxu0 0
    %294 = vmatprep.subr.bf16.mxu0 0
    %295 = vmatpush1.bf16.msra.mxu0 0
    %296 = vmatprep.subr.bf16.mxu0 0
    %297 = vmatpush1.bf16.msra.mxu0 0
    %298 = vmatprep.subr.bf16.mxu0 0
    %299 = vmatpush1.bf16.msra.mxu0 0
    %300 = vmatprep.subr.bf16.mxu0 0
    %301 = vmatpush1.bf16.msra.mxu0 0
    %302 = vmatprep.subr.bf16.mxu0 0
    %303 = vmatpush1.bf16.msra.mxu0 0
    %304 = vmatprep.mubr.bf16.mxu0 0
    %305 = vmatmul.mubr.bf16.gmra.mrb[0].mxu0 %v270
    %v306 = vpop.f32.mrb[0].mxu0
    %v307 = vadd.f32 0.0, %v306
    %v308 = vpop.f32.mrb[0].mxu0
    %v309 = vpop.f32.mrb[0].mxu0
    %v310 = vpop.f32.mrb[0].mxu0
    %311 = vdwg.mxu0
    %v312 = vadd.f32 %v245, %v307
    %v313 = vld [vmem:[%s6] sm:$0x1]
    %v315 = vlaneseq
    %v316 = vshrl.u32 %v315, 7
    %v317 = vsub.s32 0, %v316
    %v318 = vrot.slane %v313, %v317
    %v320 = vadd.f32 %v312, %v318
    %vm321 = vcmask 1041408
    %v322 = vsel %vm321, %v320, -inf
    %323 = vmax.xlane.f32.xlu0 %v322
    %v324 = vpop.xlane.xlu0 %323
    %v325 = vsub.f32 %v320, %v324
    %v326 = vmul.f32 %v325, 1.442695
    %v327 = vpow.pop %v326
    %v328 = vsel %vm321, %v327, 0.0
    %329 = vadd.xlane.f32.xlu0 %v328
    %v330 = vpop.xlane.xlu0 %329
    %v331 = vrcp.pop %v330
    %v332 = vmul.f32 %v327, %v331
    %333 = vst [vmem:[#allocation10] sm:$0x3] %v332
    // Predicated region
    $region46: #{tpu_custom_call.1} parent=1 // pred_check
      _
    $region47: #{tpu_custom_call.1} parent=1 // pred_check_branch
      %335 = sbr.rel (0) target = $region49
    $region48: #{tpu_custom_call.1} parent=1 // pred_region
      %s337 = ssub.s32 32, 32
      %338 = vsyncadd [#allocation4], %s337
      %s340 = sshll.u32 [#allocation10], 4
      %s341 = int_to_ptr.vmem [resolvable:$true] %s340
      %343 = dma.vmem_to_hbm [thread:$0]  %s341, 32, %s7, [#allocation4]
    $region49: #{tpu_custom_call.1} parent=1 // pred_fallthru
      _
    // Predicated region
    $region50: #{tpu_custom_call.1} parent=1 // pred_check
      _
    $region51: #{tpu_custom_call.1} parent=1 // pred_check_branch
      %345 = sbr.rel (0) target = $region53
    $region52: #{tpu_custom_call.1} parent=1 // pred_region
      %346 = dma.done [#allocation4], 32
    $region53: #{tpu_custom_call.1} parent=1 // pred_fallthru
      _
    %347 = vsyncpa [#allocation3], 1
    %348 = vsyncpa [#allocation6], 1
    %349 = vsyncpa [#allocation9], 1
    %350 = vsyncpa [#allocation4], 1

</llo_original>
